<compile_context>
chip_gen: v7x
topology: tpu7x:2x2x1
jax: 0.10.0
libtpu: 0.0.40
codegen_flags: <defaults>
</compile_context>

<pallas_src>
import math

import jax
import jax.numpy as jnp
from jax.experimental import pallas as pl
from jax.experimental.pallas import tpu as pltpu


# --------------------------------------------------------------------------
# Kernel
# --------------------------------------------------------------------------
def _make_gatedsum_kernel(use_seg: bool, blend_in_f32: bool):
    """Kernel over a (tile_rows, L) lane-dense block.

    Each L-lane super-row holds K original rows of width D; lanes j*D..j*D+D-1
    of super-row i are feature 0..D-1 of original row i*K + j.

    use_seg=True  : K > 1, segmented gate via one MXU matmul against a 0/1
                    block-diagonal (L, L) matrix (reduction + broadcast fused).
    use_seg=False : K == 1, gate via a plain f32 lane reduction.
    """

    def kernel(bias_ref, a_ref, b_ref, wa_ref, wb_ref, *rest):
        if use_seg:
            seg_ref, o_ref = rest
        else:
            (o_ref,) = rest

        a = a_ref[...]
        b = b_ref[...]
        a32 = a.astype(jnp.float32)
        b32 = b.astype(jnp.float32)

        # Full-width gate pre-product: p[:, j*D+d] = a*wa[d] + b*wb[d] of packed
        # row j.  wa_ref/wb_ref are lane-dense (1, L) f32, broadcast over rows.
        p = a32 * wa_ref[...] + b32 * wb_ref[...]

        if use_seg:
            # Segmented sum over each D-lane segment AND broadcast back across
            # the segment, in one MXU matmul with a 0/1 block-diagonal matrix.
            # Split p into bf16-exact hi/lo parts so the result is ~f32-exact
            # no matter how many bf16 passes the MXU uses for f32 operands.
            p_hi = p.astype(jnp.bfloat16).astype(jnp.float32)
            p_lo = p - p_hi
            seg = seg_ref[...]
            logit = (jnp.dot(p_hi, seg, preferred_element_type=jnp.float32) +
                     jnp.dot(p_lo, seg, preferred_element_type=jnp.float32))
        else:
            # One row per super-row: exact f32 lane reduction, (tm, 1).
            logit = jnp.sum(p, axis=-1, keepdims=True)

        g = jax.nn.sigmoid(logit + bias_ref[0])          # EUP

        # b + g*(a-b) == g*a + (1-g)*b (one fewer multiply).
        if blend_in_f32:
            out = b32 + g * (a32 - b32)
        else:
            # bf16/fp16 inputs: keep the blend in the input dtype (v6e/v7x have
            # bf16 VPUs; v5e upcasts internally).  Logit math above stays f32.
            out = b + g.astype(b.dtype) * (a - b)

        o_ref[...] = out.astype(o_ref.dtype)             # single full-width store

    return kernel


# --------------------------------------------------------------------------
# Wrapper helpers
# --------------------------------------------------------------------------
def _packing(D: int):
    """Pick (K, L): pack K rows of width D into one L-lane super-row."""
    if D % 128 == 0:
        return 1, D                       # already lane-aligned
    L = math.lcm(D, 128)
    if L <= 512:                          # keep the (L, L) selector small
        return L // D, L
    # TODO(synk): awkward D (lcm(D,128) > 512) stays lane-sparse (K=1, L=D).
    return 1, D


def _tile_and_vmem(R: int, L: int, itemsize: int):
    """Row-tile size + vmem limit, generation aware.

    Buffers: 3 streams (a, b, out), each double-buffered by the pipeline.
    v7x: 64 MiB physical VMEM -> 48 MiB limit / ~40 MiB of buffers.
    v5e/v6e: 128 MiB physical -> 96 MiB limit / ~88 MiB of buffers.
    """
    phys = 64 * 1024 * 1024               # conservative fallback (v7x physical)
    try:
        phys = int(pltpu.get_tpu_info().vmem_capacity_bytes)
    except Exception:
        pass
    vmem_limit = min((phys * 3) // 4, 96 * 1024 * 1024)
    budget = vmem_limit - 8 * 1024 * 1024       # headroom: weights, seg, scratch
    per_row = 3 * 2 * L * itemsize              # a, b, out, double-buffered

    t = min(budget // per_row, 16384)
    # Keep >= 4 grid steps when the input is big enough so both v7x TensorCores
    # get work under dimension_semantics=("parallel",).
    if R >= 4 * 1024:
        t = min(t, -(-R // 4))
    t = max(8, (t // 8) * 8)                    # sublane-aligned
    if R <= t:
        return int(R), int(vmem_limit)          # single block (block == array dims)
    return int(t), int(vmem_limit)


# --------------------------------------------------------------------------
# Public entry point
# --------------------------------------------------------------------------
def gated_sum(a, b, weight, bias):
    """a, b: [..., D]; weight: (1, 2*D) (nn.Linear layout); bias: (1,)."""
    if a.shape != b.shape:
        raise ValueError("The input must have the same size.")
    D = a.shape[-1]
    if weight.shape != (1, 2 * D):
        raise ValueError("Input size must match `input_dim`.")

    orig_shape = a.shape
    dtype = a.dtype
    a2 = a.reshape(-1, D)
    b2 = b.reshape(-1, D)
    N = a2.shape[0]

    # Lane packing: K rows per L-lane super-row (contiguous reshape).
    K, L = _packing(D)
    # Pad the row count so (a) it divides K and (b) there are >= 8 super-rows
    # (sublane-aligned blocks / matmul LHS).  Row padding only; cheap.
    Npad = -(-N // K) * K
    if Npad // K < 8:
        Npad = 8 * K
    if Npad != N:
        pad = ((0, Npad - N), (0, 0))
        a2 = jnp.pad(a2, pad)
        b2 = jnp.pad(b2, pad)
    R = Npad // K
    a2 = a2.reshape(R, L)
    b2 = b2.reshape(R, L)

    # Lane-dense weights: lane j*D+d carries wa[d] / wb[d].
    wa = jnp.tile(weight[:, :D].astype(jnp.float32), (1, K))      # (1, L)
    wb = jnp.tile(weight[:, D:].astype(jnp.float32), (1, K))      # (1, L)
    bias_f32 = bias.astype(jnp.float32)                           # (1,)

    itemsize = jnp.dtype(dtype).itemsize
    tile_rows, vmem_limit = _tile_and_vmem(R, L, itemsize)
    grid = (pl.cdiv(R, tile_rows),)     # ragged last block is masked by Pallas

    use_seg = K > 1
    blend_in_f32 = itemsize >= 4

    in_specs = [
        pl.BlockSpec(memory_space=pltpu.SMEM),              # bias (1,)
        pl.BlockSpec((tile_rows, L), lambda i: (i, 0)),     # a tile
        pl.BlockSpec((tile_rows, L), lambda i: (i, 0)),     # b tile
        pl.BlockSpec((1, L), lambda i: (0, 0)),             # wa (resident)
        pl.BlockSpec((1, L), lambda i: (0, 0)),             # wb (resident)
    ]
    args = [bias_f32, a2, b2, wa, wb]
    if use_seg:
        # 0/1 block-diagonal (L, L): seg[j*D+d, j*D+e] = 1.  Fuses the segmented
        # lane reduction and the gate broadcast into one MXU matmul.
        seg = jnp.kron(jnp.eye(K, dtype=jnp.float32),
                       jnp.ones((D, D), dtype=jnp.float32))
        in_specs.append(pl.BlockSpec((L, L), lambda i: (0, 0)))   # resident
        args.append(seg)

    out = pl.pallas_call(
        _make_gatedsum_kernel(use_seg, blend_in_f32),
        out_shape=jax.ShapeDtypeStruct((R, L), dtype),
        grid_spec=pltpu.PrefetchScalarGridSpec(
            num_scalar_prefetch=0,
            grid=grid,
            in_specs=in_specs,
            out_specs=pl.BlockSpec((tile_rows, L), lambda i: (i, 0)),
        ),
        compiler_params=pltpu.CompilerParams(
            dimension_semantics=("parallel",),    # megacore-shardable grid axis
            vmem_limit_bytes=vmem_limit,          # 48 MiB (v7x) / 96 MiB (v5e/v6e)
        ),
    )(*args)

    out = out.reshape(Npad, D)
    if Npad != N:
        out = out[:N]
    return out.reshape(orig_shape)


def gated_sum_ref(a, b, weight, bias):
    # Pure-JAX reference of the PyTorch forward.
    cat = jnp.concatenate([a, b], axis=-1)
    logit = cat @ weight.T + bias            # [..., 1]
    g = jax.nn.sigmoid(logit)
    return g * a + (1.0 - g) * b


if __name__ == "__main__":
    key = jax.random.PRNGKey(0)
    batch, seq, D = 2, 8, 32                 # input_dim = 32
    k1, k2, k3, k4, k5, k6 = jax.random.split(key, 6)

    a = jax.random.normal(k1, (batch, seq, D), dtype=jnp.float32)
    b = jax.random.normal(k2, (batch, seq, D), dtype=jnp.float32)

    # Deterministic nn.Linear(2*D, 1) parameters: weight (1, 2D), bias (1,)
    bound = 1.0 / (2 * D) ** 0.5
    weight = jax.random.uniform(k3, (1, 2 * D), minval=-bound, maxval=bound,
                                dtype=jnp.float32)
    bias = jax.random.uniform(k4, (1,), minval=-bound, maxval=bound,
                              dtype=jnp.float32)

    out = gated_sum(a, b, weight, bias)
    out = jax.block_until_ready(out)
    ref = gated_sum_ref(a, b, weight, bias)
    assert out.shape == a.shape
    assert jnp.allclose(out, ref, atol=1e-5, rtol=1e-5), "mismatch vs reference"

    # Second tiny check: row count not a multiple of the packing factor
    # (exercises the row-padding path; same kernel config).
    a2 = jax.random.normal(k5, (3, 5, D), dtype=jnp.float32)
    b2 = jax.random.normal(k6, (3, 5, D), dtype=jnp.float32)
    out2 = jax.block_until_ready(gated_sum(a2, b2, weight, bias))
    ref2 = gated_sum_ref(a2, b2, weight, bias)
    assert out2.shape == a2.shape
    assert jnp.allclose(out2, ref2, atol=1e-5, rtol=1e-5), "mismatch (ragged N)"

    print("KERNEL_OK")
</pallas_src>

<mosaic_0001>
module attributes {stable_mosaic.version = 11 : i64} {
  func.func @kernel(%arg0: i32, %arg1: memref<1xf32, #tpu.memory_space<smem>>, %arg2: memref<8x128xf32, #tpu.memory_space<vmem>>, %arg3: memref<8x128xf32, #tpu.memory_space<vmem>>, %arg4: memref<1x128xf32, #tpu.memory_space<vmem>>, %arg5: memref<1x128xf32, #tpu.memory_space<vmem>>, %arg6: memref<128x128xf32, #tpu.memory_space<vmem>>, %arg7: memref<8x128xf32, #tpu.memory_space<vmem>>) attributes {dimension_semantics = [#tpu.dimension_semantics<parallel>], iteration_bounds = array<i64: 1>, scalar_prefetch = 0 : i64, scratch_operands = 0 : i64, tpu.core_type = #tpu.core_type<tc>, window_params = [{transform_indices = @transform_0, window_bounds = array<i64: 1>}, {transform_indices = @transform_1, window_bounds = array<i64: 8, 128>}, {transform_indices = @transform_2, window_bounds = array<i64: 8, 128>}, {pipeline_mode = #tpu.pipeline_mode<synchronous>, transform_indices = @transform_3, window_bounds = array<i64: 1, 128>}, {pipeline_mode = #tpu.pipeline_mode<synchronous>, transform_indices = @transform_4, window_bounds = array<i64: 1, 128>}, {pipeline_mode = #tpu.pipeline_mode<synchronous>, transform_indices = @transform_5, window_bounds = array<i64: 128, 128>}, {transform_indices = @transform_6, window_bounds = array<i64: 8, 128>}]} {
    %c0 = arith.constant 0 : index
    %c0_0 = arith.constant 0 : index
    %0 = vector.load %arg2[%c0, %c0_0] : memref<8x128xf32, #tpu.memory_space<vmem>>, vector<8x128xf32>
    %c0_1 = arith.constant 0 : index
    %c0_2 = arith.constant 0 : index
    %1 = vector.load %arg3[%c0_1, %c0_2] : memref<8x128xf32, #tpu.memory_space<vmem>>, vector<8x128xf32>
    %c0_3 = arith.constant 0 : index
    %c0_4 = arith.constant 0 : index
    %2 = vector.load %arg4[%c0_3, %c0_4] : memref<1x128xf32, #tpu.memory_space<vmem>>, vector<1x128xf32>
    %3 = vector.broadcast %2 : vector<1x128xf32> to vector<8x128xf32>
    %4 = arith.mulf %0, %3 : vector<8x128xf32>
    %c0_5 = arith.constant 0 : index
    %c0_6 = arith.constant 0 : index
    %5 = vector.load %arg5[%c0_5, %c0_6] : memref<1x128xf32, #tpu.memory_space<vmem>>, vector<1x128xf32>
    %6 = vector.broadcast %5 : vector<1x128xf32> to vector<8x128xf32>
    %7 = arith.mulf %1, %6 : vector<8x128xf32>
    %8 = arith.addf %4, %7 : vector<8x128xf32>
    %9 = arith.truncf %8 : vector<8x128xf32> to vector<8x128xbf16>
    %10 = arith.extf %9 : vector<8x128xbf16> to vector<8x128xf32>
    %11 = arith.subf %8, %10 : vector<8x128xf32>
    %c0_7 = arith.constant 0 : index
    %c0_8 = arith.constant 0 : index
    %12 = vector.load %arg6[%c0_7, %c0_8] : memref<128x128xf32, #tpu.memory_space<vmem>>, vector<128x128xf32>
    %cst = arith.constant dense<0.000000e+00> : vector<8x128xf32>
    %13 = tpu.matmul %10, %12, %cst {dimension_numbers = #tpu.dot_dimension_numbers<[1], [0], [0], [1], [0, 0, 1, 1], [], []>} : vector<8x128xf32>, vector<128x128xf32>, vector<8x128xf32> -> vector<8x128xf32>
    %cst_9 = arith.constant dense<0.000000e+00> : vector<8x128xf32>
    %14 = tpu.matmul %11, %12, %cst_9 {dimension_numbers = #tpu.dot_dimension_numbers<[1], [0], [0], [1], [0, 0, 1, 1], [], []>} : vector<8x128xf32>, vector<128x128xf32>, vector<8x128xf32> -> vector<8x128xf32>
    %15 = arith.addf %13, %14 : vector<8x128xf32>
    %c0_10 = arith.constant 0 : index
    %16 = memref.load %arg1[%c0_10] : memref<1xf32, #tpu.memory_space<smem>>
    %17 = vector.broadcast %16 : f32 to vector<8x128xf32>
    %18 = arith.addf %15, %17 : vector<8x128xf32>
    %19 = arith.negf %18 : vector<8x128xf32>
    %20 = math.exp %19 : vector<8x128xf32>
    %cst_11 = arith.constant 1.000000e+00 : f32
    %21 = vector.broadcast %cst_11 : f32 to vector<8x128xf32>
    %22 = arith.addf %21, %20 : vector<8x128xf32>
    %23 = arith.divf %21, %22 : vector<8x128xf32>
    %24 = arith.subf %0, %1 : vector<8x128xf32>
    %25 = arith.mulf %23, %24 : vector<8x128xf32>
    %26 = arith.addf %1, %25 : vector<8x128xf32>
    %c0_12 = arith.constant 0 : index
    %c0_13 = arith.constant 0 : index
    %27 = vector.load %arg7[%c0_12, %c0_13] : memref<8x128xf32, #tpu.memory_space<vmem>>, vector<8x128xf32>
    tpu.vector_store %arg7[%c0_12, %c0_13], %26 {strides = array<i32>} : memref<8x128xf32, #tpu.memory_space<vmem>>, vector<8x128xf32>,
    return
  }
  func.func @transform_0(%arg0: i32) -> i32 {
    %c0_i32 = arith.constant 0 : i32
    %c0_i32_0 = arith.constant 0 : i32
    return %c0_i32 : i32
  }
  func.func @transform_1(%arg0: i32) -> (i32, i32) {
    %c0_i32 = arith.constant 0 : i32
    %c0_i32_0 = arith.constant 0 : i32
    return %arg0, %c0_i32 : i32, i32
  }
  func.func @transform_2(%arg0: i32) -> (i32, i32) {
    %c0_i32 = arith.constant 0 : i32
    %c0_i32_0 = arith.constant 0 : i32
    return %arg0, %c0_i32 : i32, i32
  }
  func.func @transform_3(%arg0: i32) -> (i32, i32) {
    %c0_i32 = arith.constant 0 : i32
    %c0_i32_0 = arith.constant 0 : i32
    %c0_i32_1 = arith.constant 0 : i32
    return %c0_i32, %c0_i32_0 : i32, i32
  }
  func.func @transform_4(%arg0: i32) -> (i32, i32) {
    %c0_i32 = arith.constant 0 : i32
    %c0_i32_0 = arith.constant 0 : i32
    %c0_i32_1 = arith.constant 0 : i32
    return %c0_i32, %c0_i32_0 : i32, i32
  }
  func.func @transform_5(%arg0: i32) -> (i32, i32) {
    %c0_i32 = arith.constant 0 : i32
    %c0_i32_0 = arith.constant 0 : i32
    %c0_i32_1 = arith.constant 0 : i32
    return %c0_i32, %c0_i32_0 : i32, i32
  }
  func.func @transform_6(%arg0: i32) -> (i32, i32) {
    %c0_i32 = arith.constant 0 : i32
    %c0_i32_0 = arith.constant 0 : i32
    return %arg0, %c0_i32 : i32, i32
  }
}

</mosaic_0001>

<llo_original>
// kernel: tpu_custom_call.1
$region0: #{tpu_custom_call.1}
  #allocation0 [shape = 'u32[]', space=smem, size = 0x4, offset = 0x4, fixed_abs, tag = 'smem constant byte address 0x4 - core index']
  #allocation1 [shape = 'u32[144,128]{1,0:T(1,128)}', space=vmem, size = 0x12000, scoped, tag = 'internal scratch']
  #allocation2 [shape = 'f32[1]{0:T(128)S(6)}', space=smem, size = 0x200, scoped, tag = 'scoped memory for tpu_custom_call.1']
  %s0 = inlined_call_operand.<no memory space> [shape: f32[1], index: 0, kind: input, shape index: {}]
  %s1 = inlined_call_operand.hbm [shape: f32[8,128], index: 1, kind: input, shape index: {}]
  %s2 = inlined_call_operand.hbm [shape: f32[8,128], index: 2, kind: input, shape index: {}]
  %s3 = inlined_call_operand.vmem [shape: f32[1,128], index: 3, kind: input, shape index: {}]
  %s4 = inlined_call_operand.vmem [shape: f32[1,128], index: 4, kind: input, shape index: {}]
  %s5 = inlined_call_operand.hbm [shape: f32[128,128], index: 5, kind: input, shape index: {}]
  %s6 = inlined_call_operand.hbm [shape: f32[8,128], index: 6, kind: output, shape index: {}]
  %s7 = sld [smem:[#allocation0]]
  $region46: #{tpu_custom_call.1} parent=0
    _
  %s9 = ssub.s32 1, %s7
  %s10 = scalar_select 0, %s9, %s7
  %11 = sst [smem:[#allocation2]] %s0
  $region1: #{tpu_custom_call.1} parent=0
    #allocation3 [shape = 'u8[4096]{0}', space=vmem, size = 0x1000, scoped, tag = 'input window, operand 1, single buffered']
    #allocation4 [shape = 's32[1]{0}', space=sflag, size = 0x4, scoped, tag = 'scoped memory for tpu_custom_call.1']
    #allocation5 [shape = 's32[1]{0}', space=sflag, size = 0x4, scoped, tag = 'scoped memory for tpu_custom_call.1']
    #allocation6 [shape = 'u8[4096]{0}', space=vmem, size = 0x1000, scoped, tag = 'input window, operand 2, single buffered']
    #allocation7 [shape = 's32[1]{0}', space=sflag, size = 0x4, scoped, tag = 'scoped memory for tpu_custom_call.1']
    #allocation8 [shape = 'u8[65536]{0}', space=vmem, size = 0x10000, scoped, tag = 'input window, operand 5, single buffered']
    #allocation9 [shape = 'u8[4096]{0}', space=vmem, size = 0x1000, scoped, tag = 'output window, operand 0, single buffered']
    %12 = vsyncpa [#allocation4], 0
    %13 = vsyncpa [#allocation7], 0
    %14 = vsyncpa [#allocation5], 0
    // Predicated region
    $region2: #{tpu_custom_call.1} parent=1 // pred_check
      _
    $region3: #{tpu_custom_call.1} parent=1 // pred_check_branch
      %16 = sbr.rel (0) target = $region5
    $region4: #{tpu_custom_call.1} parent=1 // pred_region
      _
    $region5: #{tpu_custom_call.1} parent=1 // pred_fallthru
      _
    // Predicated region
    $region6: #{tpu_custom_call.1} parent=1 // pred_check
      _
    $region7: #{tpu_custom_call.1} parent=1 // pred_check_branch
      %18 = sbr.rel (0) target = $region9
    $region8: #{tpu_custom_call.1} parent=1 // pred_region
      %s20 = ssub.s32 128, 128
      %21 = vsyncadd [#allocation4], %s20
      %s23 = sshll.u32 [#allocation3], 4
      %s24 = int_to_ptr.vmem [resolvable:$true] %s23
      %26 = dma.hbm_to_vmem [thread:$0]  %s1, 128, %s24, [#allocation4]
    $region9: #{tpu_custom_call.1} parent=1 // pred_fallthru
      _
    // Predicated region
    $region10: #{tpu_custom_call.1} parent=1 // pred_check
      _
    $region11: #{tpu_custom_call.1} parent=1 // pred_check_branch
      %28 = sbr.rel (0) target = $region13
    $region12: #{tpu_custom_call.1} parent=1 // pred_region
      %s30 = ssub.s32 128, 128
      %31 = vsyncadd [#allocation7], %s30
      %s33 = sshll.u32 [#allocation6], 4
      %s34 = int_to_ptr.vmem [resolvable:$true] %s33
      %36 = dma.hbm_to_vmem [thread:$0]  %s2, 128, %s34, [#allocation7]
    $region13: #{tpu_custom_call.1} parent=1 // pred_fallthru
      _
    // Predicated region
    $region14: #{tpu_custom_call.1} parent=1 // pred_check
      _
    $region15: #{tpu_custom_call.1} parent=1 // pred_check_branch
      %38 = sbr.rel (0) target = $region17
    $region16: #{tpu_custom_call.1} parent=1 // pred_region
      _
    $region17: #{tpu_custom_call.1} parent=1 // pred_fallthru
      _
    // Predicated region
    $region18: #{tpu_custom_call.1} parent=1 // pred_check
      _
    $region19: #{tpu_custom_call.1} parent=1 // pred_check_branch
      %40 = sbr.rel (0) target = $region21
    $region20: #{tpu_custom_call.1} parent=1 // pred_region
      _
    $region21: #{tpu_custom_call.1} parent=1 // pred_fallthru
      _
    // Predicated region
    $region22: #{tpu_custom_call.1} parent=1 // pred_check
      _
    $region23: #{tpu_custom_call.1} parent=1 // pred_check_branch
      %42 = sbr.rel (0) target = $region25
    $region24: #{tpu_custom_call.1} parent=1 // pred_region
      %s44 = ssub.s32 2048, 2048
      %45 = vsyncadd [#allocation7], %s44
      %s46 = sshll.u32 [#allocation8], 4
      %s47 = int_to_ptr.vmem [resolvable:$true] %s46
      %52 = dma.hbm_to_vmem [thread:$0]  %s5, 2048, %s47, [#allocation7], 128, 128, 8
    $region25: #{tpu_custom_call.1} parent=1 // pred_fallthru
      _
    // Predicated region
    $region26: #{tpu_custom_call.1} parent=1 // pred_check
      _
    $region27: #{tpu_custom_call.1} parent=1 // pred_check_branch
      %54 = sbr.rel (0) target = $region29
    $region28: #{tpu_custom_call.1} parent=1 // pred_region
      %55 = dma.done [#allocation4], 128
    $region29: #{tpu_custom_call.1} parent=1 // pred_fallthru
      _
    // Predicated region
    $region30: #{tpu_custom_call.1} parent=1 // pred_check
      _
    $region31: #{tpu_custom_call.1} parent=1 // pred_check_branch
      %57 = sbr.rel (0) target = $region33
    $region32: #{tpu_custom_call.1} parent=1 // pred_region
      %58 = dma.done [#allocation7], 128
    $region33: #{tpu_custom_call.1} parent=1 // pred_fallthru
      _
    // Predicated region
    $region34: #{tpu_custom_call.1} parent=1 // pred_check
      _
    $region35: #{tpu_custom_call.1} parent=1 // pred_check_branch
      %60 = sbr.rel (0) target = $region37
    $region36: #{tpu_custom_call.1} parent=1 // pred_region
      %61 = dma.done [#allocation7], 2048
    $region37: #{tpu_custom_call.1} parent=1 // pred_fallthru
      _
    %v62 = vld [vmem:[#allocation3] sm:$0xff]
    %v63 = vld [vmem:[#allocation6] sm:$0xff]
    %v64 = vld [vmem:[%s3] sm:$0x1]
    %v66 = vlaneseq
    %v67 = vshrl.u32 %v66, 7
    %v68 = vsub.s32 0, %v67
    %v69 = vrot.slane %v64, %v68
    %v71 = vmul.f32 %v62, %v69
    %v72 = vld [vmem:[%s4] sm:$0x1]
    %v74 = vlaneseq
    %v75 = vshrl.u32 %v74, 7
    %v76 = vsub.s32 0, %v75
    %v77 = vrot.slane %v72, %v76
    %v79 = vmul.f32 %v63, %v77
    %v80 = vadd.f32 %v71, %v79
    %v81 = vpack.c.bf16 %v80, %v80
    %v82 = vunpack.c.l.bf16 %v81
    %v83 = vsub.f32 %v80, %v82
    %v84 = vld [vmem:[#allocation8] sm:$0xff]
    %v85 = vld [vmem:[#allocation8 + $0x8] sm:$0xff]
    %v86 = vld [vmem:[#allocation8 + $0x10] sm:$0xff]
    %v87 = vld [vmem:[#allocation8 + $0x18] sm:$0xff]
    %v88 = vld [vmem:[#allocation8 + $0x20] sm:$0xff]
    %v89 = vld [vmem:[#allocation8 + $0x28] sm:$0xff]
    %v90 = vld [vmem:[#allocation8 + $0x30] sm:$0xff]
    %v91 = vld [vmem:[#allocation8 + $0x38] sm:$0xff]
    %v92 = vld [vmem:[#allocation8 + $0x40] sm:$0xff]
    %v93 = vld [vmem:[#allocation8 + $0x48] sm:$0xff]
    %v94 = vld [vmem:[#allocation8 + $0x50] sm:$0xff]
    %v95 = vld [vmem:[#allocation8 + $0x58] sm:$0xff]
    %v96 = vld [vmem:[#allocation8 + $0x60] sm:$0xff]
    %v97 = vld [vmem:[#allocation8 + $0x68] sm:$0xff]
    %v98 = vld [vmem:[#allocation8 + $0x70] sm:$0xff]
    %v99 = vld [vmem:[#allocation8 + $0x78] sm:$0xff]
    %100 = vmatprep.subr.mxu0 0.0
    %101 = vmatpush1.msra.mxu0 %v84
    %102 = vmatprep.subr.mxu0 0.0
    %103 = vmatpush1.msra.mxu0 %v85
    %104 = vmatprep.subr.mxu0 0.0
    %105 = vmatpush1.msra.mxu0 %v86
    %106 = vmatprep.subr.mxu0 0.0
    %107 = vmatpush1.msra.mxu0 %v87
    %108 = vmatprep.subr.mxu0 0.0
    %109 = vmatpush1.msra.mxu0 %v88
    %110 = vmatprep.subr.mxu0 0.0
    %111 = vmatpush1.msra.mxu0 %v89
    %112 = vmatprep.subr.mxu0 0.0
    %113 = vmatpush1.msra.mxu0 %v90
    %114 = vmatprep.subr.mxu0 0.0
    %115 = vmatpush1.msra.mxu0 %v91
    %116 = vmatprep.subr.mxu0 0.0
    %117 = vmatpush1.msra.mxu0 %v92
    %118 = vmatprep.subr.mxu0 0.0
    %119 = vmatpush1.msra.mxu0 %v93
    %120 = vmatprep.subr.mxu0 0.0
    %121 = vmatpush1.msra.mxu0 %v94
    %122 = vmatprep.subr.mxu0 0.0
    %123 = vmatpush1.msra.mxu0 %v95
    %124 = vmatprep.subr.mxu0 0.0
    %125 = vmatpush1.msra.mxu0 %v96
    %126 = vmatprep.subr.mxu0 0.0
    %127 = vmatpush1.msra.mxu0 %v97
    %128 = vmatprep.subr.mxu0 0.0
    %129 = vmatpush1.msra.mxu0 %v98
    %130 = vmatprep.subr.mxu0 0.0
    %131 = vmatpush1.msra.mxu0 %v99
    %132 = vmatprep.subr.mxu0 0.0
    %133 = vmatpush1.msra.mxu0 0.0
    %134 = vmatprep.subr.mxu0 0.0
    %135 = vmatpush1.msra.mxu0 0.0
    %136 = vmatprep.subr.mxu0 0.0
    %137 = vmatpush1.msra.mxu0 0.0
    %138 = vmatprep.subr.mxu0 0.0
    %139 = vmatpush1.msra.mxu0 0.0
    %140 = vmatprep.subr.mxu0 0.0
    %141 = vmatpush1.msra.mxu0 0.0
    %142 = vmatprep.subr.mxu0 0.0
    %143 = vmatpush1.msra.mxu0 0.0
    %144 = vmatprep.subr.mxu0 0.0
    %145 = vmatpush1.msra.mxu0 0.0
    %146 = vmatprep.subr.mxu0 0.0
    %147 = vmatpush1.msra.mxu0 0.0
    %148 = vmatprep.subr.mxu0 0.0
    %149 = vmatpush1.msra.mxu0 0.0
    %150 = vmatprep.subr.mxu0 0.0
    %151 = vmatpush1.msra.mxu0 0.0
    %152 = vmatprep.subr.mxu0 0.0
    %153 = vmatpush1.msra.mxu0 0.0
    %154 = vmatprep.subr.mxu0 0.0
    %155 = vmatpush1.msra.mxu0 0.0
    %156 = vmatprep.subr.mxu0 0.0
    %157 = vmatpush1.msra.mxu0 0.0
    %158 = vmatprep.subr.mxu0 0.0
    %159 = vmatpush1.msra.mxu0 0.0
    %160 = vmatprep.subr.mxu0 0.0
    %161 = vmatpush1.msra.mxu0 0.0
    %162 = vmatprep.subr.mxu0 0.0
    %163 = vmatpush1.msra.mxu0 0.0
    %164 = vmatprep.mubr.f32.mxu0 0.0
    %165 = vmatmul.mubr.f32.gmra.mrb[0].mxu0 %v83
    %v166 = vpop.f32.mrb[0].mxu0
    %v167 = vadd.f32 0.0, %v166
    %v168 = vpop.f32.mrb[0].mxu0
    %169 = vdwg.mxu0
    %170 = vmatprep.subr.mxu0 0.0
    %171 = vmatpush1.msra.mxu0 %v84
    %172 = vmatprep.subr.mxu0 0.0
    %173 = vmatpush1.msra.mxu0 %v85
    %174 = vmatprep.subr.mxu0 0.0
    %175 = vmatpush1.msra.mxu0 %v86
    %176 = vmatprep.subr.mxu0 0.0
    %177 = vmatpush1.msra.mxu0 %v87
    %178 = vmatprep.subr.mxu0 0.0
    %179 = vmatpush1.msra.mxu0 %v88
    %180 = vmatprep.subr.mxu0 0.0
    %181 = vmatpush1.msra.mxu0 %v89
    %182 = vmatprep.subr.mxu0 0.0
    %183 = vmatpush1.msra.mxu0 %v90
    %184 = vmatprep.subr.mxu0 0.0
    %185 = vmatpush1.msra.mxu0 %v91
    %186 = vmatprep.subr.mxu0 0.0
    %187 = vmatpush1.msra.mxu0 %v92
    %188 = vmatprep.subr.mxu0 0.0
    %189 = vmatpush1.msra.mxu0 %v93
    %190 = vmatprep.subr.mxu0 0.0
    %191 = vmatpush1.msra.mxu0 %v94
    %192 = vmatprep.subr.mxu0 0.0
    %193 = vmatpush1.msra.mxu0 %v95
    %194 = vmatprep.subr.mxu0 0.0
    %195 = vmatpush1.msra.mxu0 %v96
    %196 = vmatprep.subr.mxu0 0.0
    %197 = vmatpush1.msra.mxu0 %v97
    %198 = vmatprep.subr.mxu0 0.0
    %199 = vmatpush1.msra.mxu0 %v98
    %200 = vmatprep.subr.mxu0 0.0
    %201 = vmatpush1.msra.mxu0 %v99
    %202 = vmatprep.subr.mxu0 0.0
    %203 = vmatpush1.msra.mxu0 0.0
    %204 = vmatprep.subr.mxu0 0.0
    %205 = vmatpush1.msra.mxu0 0.0
    %206 = vmatprep.subr.mxu0 0.0
    %207 = vmatpush1.msra.mxu0 0.0
    %208 = vmatprep.subr.mxu0 0.0
    %209 = vmatpush1.msra.mxu0 0.0
    %210 = vmatprep.subr.mxu0 0.0
    %211 = vmatpush1.msra.mxu0 0.0
    %212 = vmatprep.subr.mxu0 0.0
    %213 = vmatpush1.msra.mxu0 0.0
    %214 = vmatprep.subr.mxu0 0.0
    %215 = vmatpush1.msra.mxu0 0.0
    %216 = vmatprep.subr.mxu0 0.0
    %217 = vmatpush1.msra.mxu0 0.0
    %218 = vmatprep.subr.mxu0 0.0
    %219 = vmatpush1.msra.mxu0 0.0
    %220 = vmatprep.subr.mxu0 0.0
    %221 = vmatpush1.msra.mxu0 0.0
    %222 = vmatprep.subr.mxu0 0.0
    %223 = vmatpush1.msra.mxu0 0.0
    %224 = vmatprep.subr.mxu0 0.0
    %225 = vmatpush1.msra.mxu0 0.0
    %226 = vmatprep.subr.mxu0 0.0
    %227 = vmatpush1.msra.mxu0 0.0
    %228 = vmatprep.subr.mxu0 0.0
    %229 = vmatpush1.msra.mxu0 0.0
    %230 = vmatprep.subr.mxu0 0.0
    %231 = vmatpush1.msra.mxu0 0.0
    %232 = vmatprep.subr.mxu0 0.0
    %233 = vmatpush1.msra.mxu0 0.0
    %234 = vmatprep.mubr.f32.mxu0 0.0
    %235 = vmatmul.mubr.f32.gmra.mrb[0].mxu0 %v82
    %v236 = vpop.f32.mrb[0].mxu0
    %v237 = vadd.f32 %v167, %v236
    %v238 = vpop.f32.mrb[0].mxu0
    %239 = vdwg.mxu0
    %s240 = sld [smem:[#allocation2]]
    %v241 = vstv %s240
    %v242 = vadd.f32 %v237, %v241
    %v243 = vxor.u32 %v242, 2147483648
    %v244 = vmul.f32 %v243, 1.442695
    %v245 = vpow.pop %v244
    %v246 = vadd.f32 %v245, 1.0
    %v247 = vrcp.pop %v246
    %v248 = vmul.f32 1.0, %v247
    %v249 = vsub.f32 %v62, %v63
    %v250 = vmul.f32 %v248, %v249
    %v251 = vadd.f32 %v63, %v250
    %252 = vst [vmem:[#allocation9] sm:$0xff] %v251
    // Predicated region
    $region38: #{tpu_custom_call.1} parent=1 // pred_check
      _
    $region39: #{tpu_custom_call.1} parent=1 // pred_check_branch
      %254 = sbr.rel (0) target = $region41
    $region40: #{tpu_custom_call.1} parent=1 // pred_region
      %s256 = ssub.s32 128, 128
      %257 = vsyncadd [#allocation5], %s256
      %s259 = sshll.u32 [#allocation9], 4
      %s260 = int_to_ptr.vmem [resolvable:$true] %s259
      %262 = dma.vmem_to_hbm [thread:$0]  %s260, 128, %s6, [#allocation5]
    $region41: #{tpu_custom_call.1} parent=1 // pred_fallthru
      _
    // Predicated region
    $region42: #{tpu_custom_call.1} parent=1 // pred_check
      _
    $region43: #{tpu_custom_call.1} parent=1 // pred_check_branch
      %264 = sbr.rel (0) target = $region45
    $region44: #{tpu_custom_call.1} parent=1 // pred_region
      %265 = dma.done [#allocation5], 128
    $region45: #{tpu_custom_call.1} parent=1 // pred_fallthru
      _
    %266 = vsyncpa [#allocation4], 1
    %267 = vsyncpa [#allocation7], 1
    %268 = vsyncpa [#allocation5], 1

</llo_original>
